<compile_context>
chip_gen: v7x
topology: tpu7x:2x2x1
jax: 0.10.0
libtpu: 0.0.40
codegen_flags: <defaults>
</compile_context>

<pallas_src>
import jax
import jax.numpy as jnp
from jax.experimental import pallas as pl
from jax.experimental.pallas import tpu as pltpu


def _round_up(v: int, m: int) -> int:
    return (v + m - 1) // m * m


def _cdiv(a: int, b: int) -> int:
    return -(-a // b)


def ts_kernel(temp_ref, x_ref, w_ref, out_ref):
    """One node-tile grid step: full-K matmul, temperature scaling fused into the store."""
    inv_t = 1.0 / temp_ref[0]  # exact scalar reciprocal (scalar unit), then VPU multiply
    logits = jnp.dot(
        x_ref[...].astype(jnp.bfloat16),  # in-kernel cast: x streamed from HBM as f32
        w_ref[...],                       # bf16 weights, resident in VMEM across the grid
        preferred_element_type=jnp.float32,
    )
    out_ref[...] = logits * inv_t


def _pick_tm(N: int, F: int, C_pad: int, tm_target: int, budget_bytes: int) -> int:
    """Largest node tile (multiple of 8) fitting the VMEM budget, nudged to an even
    tile count for balanced v7x megacore sharding."""
    tm = _round_up(min(tm_target, _round_up(N, 8)), 8)

    def footprint(t: int) -> int:
        # double-buffered f32 x tile + (conservatively 2x) bf16 W + double-buffered f32 out
        return 2 * t * F * 4 + 2 * F * C_pad * 2 + 2 * t * C_pad * 4

    while tm > 8 and footprint(tm) > budget_bytes:
        tm = _round_up(max(8, tm // 2), 8)

    n_tiles = _cdiv(N, tm)
    if n_tiles > 1 and n_tiles % 2 == 1:
        # One extra (smaller) tile to make the count even -> both v7x TCs stay busy.
        tm_alt = _round_up(_cdiv(N, n_tiles + 1), 8)
        if tm_alt >= 8 and _cdiv(N, tm_alt) == n_tiles + 1:
            tm = tm_alt
    return tm


def ts_forward(x, edge_index, weight, temperature, *,
               tm=1024, lane_align=128, vmem_budget=32 * 1024 * 1024):
    """Pallas-backed TS forward.

    x:           [N, F] node features (f32)
    edge_index:  [2, E] (ignored by the linear stand-in backbone)
    weight:      [F, C] backbone projection
    temperature: [1]    learned scalar temperature
    returns      [N, C] calibrated logits = (x @ W) / temperature
    """
    del edge_index  # TODO(synk): GNN message passing not translatable; edges unused.

    N, F = x.shape
    F_w, C = weight.shape
    assert F == F_w, "x / weight feature dims must match"

    # Lane-dense class dim (full 128-lane vst); W pad is tiny and done once.
    C_pad = _round_up(C, lane_align)
    w_p = jnp.pad(weight.astype(jnp.bfloat16), ((0, 0), (0, C_pad - C)))
    temp = jnp.reshape(temperature.astype(jnp.float32), (1,))

    # Node tile: single-K-tile design assumes the F x C_pad weight slab and one x tile
    # fit VMEM (true for any realistic calibrator shape).
    # TODO(synk): very large F would need a K-tiled accumulator variant.
    tm_eff = _pick_tm(N, F, C_pad, tm, vmem_budget)
    grid = (_cdiv(N, tm_eff),)  # cdiv grid: boundary node tile is clipped, no N padding

    footprint = 2 * tm_eff * F * 4 + 2 * F * C_pad * 2 + 2 * tm_eff * C_pad * 4
    vmem_limit = int(min(48 * 1024 * 1024, max(16 * 1024 * 1024, 2 * footprint)))

    out_pad = pl.pallas_call(
        ts_kernel,
        out_shape=jax.ShapeDtypeStruct((N, C_pad), jnp.float32),
        grid=grid,
        in_specs=[
            pl.BlockSpec(memory_space=pltpu.SMEM),               # temperature scalar
            pl.BlockSpec((tm_eff, F), lambda i: (i, 0)),          # x tile   [tm, F] (f32)
            pl.BlockSpec((F, C_pad), lambda i: (0, 0)),           # W        [F, C_pad] resident
        ],
        out_specs=pl.BlockSpec((tm_eff, C_pad), lambda i: (i, 0)),  # out tile [tm, C_pad]
        compiler_params=pltpu.CompilerParams(
            dimension_semantics=("parallel",),
            vmem_limit_bytes=vmem_limit,
        ),
    )(temp, x, w_p)

    return out_pad[:, :C]


def _reference(x, weight, temperature):
    # Reference with the same bf16 input rounding as the kernel (f32 accumulate).
    x_r = x.astype(jnp.bfloat16).astype(jnp.float32)
    w_r = weight.astype(jnp.bfloat16).astype(jnp.float32)
    return (x_r @ w_r) / temperature[0]


if __name__ == "__main__":
    key = jax.random.PRNGKey(0)
    kx, kw, ke, kx2, kw2 = jax.random.split(key, 5)

    # Small shapes consistent with the module (nodes x features -> classes).
    N, F, C = 8, 32, 16
    x = jax.random.normal(kx, (N, F), dtype=jnp.float32)
    weight = jax.random.normal(kw, (F, C), dtype=jnp.float32) * 0.1
    # PyG-style edge list [2, E]; unused by the linear stand-in backbone.
    edge_index = jax.random.randint(ke, (2, 16), 0, N, dtype=jnp.int32)
    # nn.Parameter(torch.ones(1)); use 1.5 for a non-trivial scaling check.
    temperature = jnp.array([1.5], dtype=jnp.float32)

    out = ts_forward(x, edge_index, weight, temperature)
    out = jax.block_until_ready(out)
    ref = _reference(x, weight, temperature)
    assert out.shape == (N, C)
    assert jnp.allclose(out, ref, atol=1e-3, rtol=1e-3), float(jnp.max(jnp.abs(out - ref)))

    # Second check exercising the multi-tile cdiv grid (N, F, C not tile/lane aligned).
    N2, F2, C2 = 1030, 600, 10
    x2 = jax.random.normal(kx2, (N2, F2), dtype=jnp.float32)
    w2 = jax.random.normal(kw2, (F2, C2), dtype=jnp.float32) * 0.05
    out2 = ts_forward(x2, edge_index, w2, temperature)
    out2 = jax.block_until_ready(out2)
    ref2 = _reference(x2, w2, temperature)
    assert out2.shape == (N2, C2)
    assert jnp.allclose(out2, ref2, atol=1e-2, rtol=1e-2), float(jnp.max(jnp.abs(out2 - ref2)))

    print("KERNEL_OK")
</pallas_src>

<mosaic_0001>
module attributes {stable_mosaic.version = 11 : i64} {
  func.func @ts_kernel(%arg0: i32, %arg1: memref<1xf32, #tpu.memory_space<smem>>, %arg2: memref<8x32xf32, #tpu.memory_space<vmem>>, %arg3: memref<32x128xbf16, #tpu.memory_space<vmem>>, %arg4: memref<8x128xf32, #tpu.memory_space<vmem>>) attributes {dimension_semantics = [#tpu.dimension_semantics<parallel>], iteration_bounds = array<i64: 1>, scalar_prefetch = 0 : i64, scratch_operands = 0 : i64, tpu.core_type = #tpu.core_type<tc>, window_params = [{transform_indices = @transform_0, window_bounds = array<i64: 1>}, {transform_indices = @transform_1, window_bounds = array<i64: 8, 32>}, {pipeline_mode = #tpu.pipeline_mode<synchronous>, transform_indices = @transform_2, window_bounds = array<i64: 32, 128>}, {transform_indices = @transform_3, window_bounds = array<i64: 8, 128>}]} {
    %c0 = arith.constant 0 : index
    %0 = memref.load %arg1[%c0] : memref<1xf32, #tpu.memory_space<smem>>
    %cst = arith.constant 1.000000e+00 : f32
    %1 = arith.divf %cst, %0 : f32
    %c0_0 = arith.constant 0 : index
    %c0_1 = arith.constant 0 : index
    %2 = vector.load %arg2[%c0_0, %c0_1] : memref<8x32xf32, #tpu.memory_space<vmem>>, vector<8x32xf32>
    %3 = arith.truncf %2 : vector<8x32xf32> to vector<8x32xbf16>
    %c0_2 = arith.constant 0 : index
    %c0_3 = arith.constant 0 : index
    %4 = vector.load %arg3[%c0_2, %c0_3] : memref<32x128xbf16, #tpu.memory_space<vmem>>, vector<32x128xbf16>
    %cst_4 = arith.constant dense<0.000000e+00> : vector<8x128xf32>
    %5 = tpu.matmul %3, %4, %cst_4 {dimension_numbers = #tpu.dot_dimension_numbers<[1], [0], [0], [1], [0, 0, 1, 1], [], []>} : vector<8x32xbf16>, vector<32x128xbf16>, vector<8x128xf32> -> vector<8x128xf32>
    %6 = vector.broadcast %1 : f32 to vector<8x128xf32>
    %7 = arith.mulf %5, %6 : vector<8x128xf32>
    %c0_5 = arith.constant 0 : index
    %c0_6 = arith.constant 0 : index
    %8 = vector.load %arg4[%c0_5, %c0_6] : memref<8x128xf32, #tpu.memory_space<vmem>>, vector<8x128xf32>
    tpu.vector_store %arg4[%c0_5, %c0_6], %7 {strides = array<i32>} : memref<8x128xf32, #tpu.memory_space<vmem>>, vector<8x128xf32>,
    return
  }
  func.func @transform_0(%arg0: i32) -> i32 {
    %c0_i32 = arith.constant 0 : i32
    %c0_i32_0 = arith.constant 0 : i32
    return %c0_i32 : i32
  }
  func.func @transform_1(%arg0: i32) -> (i32, i32) {
    %c0_i32 = arith.constant 0 : i32
    %c0_i32_0 = arith.constant 0 : i32
    return %arg0, %c0_i32 : i32, i32
  }
  func.func @transform_2(%arg0: i32) -> (i32, i32) {
    %c0_i32 = arith.constant 0 : i32
    %c0_i32_0 = arith.constant 0 : i32
    %c0_i32_1 = arith.constant 0 : i32
    return %c0_i32, %c0_i32_0 : i32, i32
  }
  func.func @transform_3(%arg0: i32) -> (i32, i32) {
    %c0_i32 = arith.constant 0 : i32
    %c0_i32_0 = arith.constant 0 : i32
    return %arg0, %c0_i32 : i32, i32
  }
}

</mosaic_0001>

<llo_original>
// kernel: tpu_custom_call.1
$region0: #{tpu_custom_call.1}
  #allocation0 [shape = 'u32[]', space=smem, size = 0x4, offset = 0x4, fixed_abs, tag = 'smem constant byte address 0x4 - core index']
  #allocation1 [shape = 'u32[144,128]{1,0:T(1,128)}', space=vmem, size = 0x12000, scoped, tag = 'internal scratch']
  #allocation2 [shape = 'f32[1]{0:T(128)S(6)}', space=smem, size = 0x200, scoped, tag = 'scoped memory for tpu_custom_call.1']
  %s0 = inlined_call_operand.<no memory space> [shape: f32[1], index: 0, kind: input, shape index: {}]
  %s1 = inlined_call_operand.hbm [shape: f32[8,32], index: 1, kind: input, shape index: {}]
  %s2 = inlined_call_operand.hbm [shape: bf16[32,128], index: 2, kind: input, shape index: {}]
  %s3 = inlined_call_operand.hbm [shape: f32[8,128], index: 3, kind: output, shape index: {}]
  %s4 = sld [smem:[#allocation0]]
  $region30: #{tpu_custom_call.1} parent=0
    _
  %s6 = ssub.s32 1, %s4
  %s7 = scalar_select 0, %s6, %s4
  %8 = sst [smem:[#allocation2]] %s0
  $region1: #{tpu_custom_call.1} parent=0
    #allocation3 [shape = 'u8[4096]{0}', space=vmem, size = 0x1000, scoped, tag = 'input window, operand 1, single buffered']
    #allocation4 [shape = 's32[1]{0}', space=sflag, size = 0x4, scoped, tag = 'scoped memory for tpu_custom_call.1']
    #allocation5 [shape = 's32[1]{0}', space=sflag, size = 0x4, scoped, tag = 'scoped memory for tpu_custom_call.1']
    #allocation6 [shape = 'u8[8192]{0}', space=vmem, size = 0x2000, scoped, tag = 'input window, operand 2, single buffered']
    #allocation7 [shape = 's32[1]{0}', space=sflag, size = 0x4, scoped, tag = 'scoped memory for tpu_custom_call.1']
    #allocation8 [shape = 'u8[4096]{0}', space=vmem, size = 0x1000, scoped, tag = 'output window, operand 0, single buffered']
    %9 = vsyncpa [#allocation4], 0
    %10 = vsyncpa [#allocation7], 0
    %11 = vsyncpa [#allocation5], 0
    // Predicated region
    $region2: #{tpu_custom_call.1} parent=1 // pred_check
      _
    $region3: #{tpu_custom_call.1} parent=1 // pred_check_branch
      %13 = sbr.rel (0) target = $region5
    $region4: #{tpu_custom_call.1} parent=1 // pred_region
      _
    $region5: #{tpu_custom_call.1} parent=1 // pred_fallthru
      _
    // Predicated region
    $region6: #{tpu_custom_call.1} parent=1 // pred_check
      _
    $region7: #{tpu_custom_call.1} parent=1 // pred_check_branch
      %15 = sbr.rel (0) target = $region9
    $region8: #{tpu_custom_call.1} parent=1 // pred_region
      %s17 = ssub.s32 128, 128
      %18 = vsyncadd [#allocation4], %s17
      %s20 = sshll.u32 [#allocation3], 4
      %s21 = int_to_ptr.vmem [resolvable:$true] %s20
      %23 = dma.hbm_to_vmem [thread:$0]  %s1, 128, %s21, [#allocation4]
    $region9: #{tpu_custom_call.1} parent=1 // pred_fallthru
      _
    // Predicated region
    $region10: #{tpu_custom_call.1} parent=1 // pred_check
      _
    $region11: #{tpu_custom_call.1} parent=1 // pred_check_branch
      %25 = sbr.rel (0) target = $region13
    $region12: #{tpu_custom_call.1} parent=1 // pred_region
      %s27 = ssub.s32 256, 256
      %28 = vsyncadd [#allocation7], %s27
      %s29 = sshll.u32 [#allocation6], 4
      %s30 = int_to_ptr.vmem [resolvable:$true] %s29
      %35 = dma.hbm_to_vmem [thread:$0]  %s2, 256, %s30, [#allocation7], 64, 64, 4
    $region13: #{tpu_custom_call.1} parent=1 // pred_fallthru
      _
    // Predicated region
    $region14: #{tpu_custom_call.1} parent=1 // pred_check
      _
    $region15: #{tpu_custom_call.1} parent=1 // pred_check_branch
      %37 = sbr.rel (0) target = $region17
    $region16: #{tpu_custom_call.1} parent=1 // pred_region
      %38 = dma.done [#allocation4], 128
    $region17: #{tpu_custom_call.1} parent=1 // pred_fallthru
      _
    // Predicated region
    $region18: #{tpu_custom_call.1} parent=1 // pred_check
      _
    $region19: #{tpu_custom_call.1} parent=1 // pred_check_branch
      %40 = sbr.rel (0) target = $region21
    $region20: #{tpu_custom_call.1} parent=1 // pred_region
      %41 = dma.done [#allocation7], 256
    $region21: #{tpu_custom_call.1} parent=1 // pred_fallthru
      _
    %s43 = sld [smem:[#allocation2]]
    %v44 = vstv %s43
    %v45 = vrcp.pop %v44
    %s46 = vtos %v45
    %v47 = vld [vmem:[#allocation3] sm:$0xff]
    %v48 = vpack.c.bf16 %v47, %v47
    %v49 = vld [vmem:[#allocation6] sm:$0xf]
    %v50 = vld [vmem:[#allocation6 + $0x4] sm:$0xf]
    %v51 = vld [vmem:[#allocation6 + $0x8] sm:$0xf]
    %v52 = vld [vmem:[#allocation6 + $0xc] sm:$0xf]
    %v57 = vunpack.c.l.b16 %v49
    %v58 = vunpack.c.l.b16 %v50
    %v59 = vunpack.c.l.b16 %v51
    %v60 = vunpack.c.l.b16 %v52
    %v61 = vpack.c.b16 %v58, %v57
    %v62 = vpack.c.b16 %v60, %v59
    %vm65 = vcmask 261120
    %v67 = vsel %vm65, %v48, 0
    %69 = vmatprep.subr.bf16.mxu0 0
    %70 = vmatpush1.bf16.msra.mxu0 %v61
    %71 = vmatprep.subr.bf16.mxu0 0
    %72 = vmatpush1.bf16.msra.mxu0 %v62
    %73 = vmatprep.subr.bf16.mxu0 0
    %74 = vmatpush1.bf16.msra.mxu0 0
    %75 = vmatprep.subr.bf16.mxu0 0
    %76 = vmatpush1.bf16.msra.mxu0 0
    %77 = vmatprep.subr.bf16.mxu0 0
    %78 = vmatpush1.bf16.msra.mxu0 0
    %79 = vmatprep.subr.bf16.mxu0 0
    %80 = vmatpush1.bf16.msra.mxu0 0
    %81 = vmatprep.subr.bf16.mxu0 0
    %82 = vmatpush1.bf16.msra.mxu0 0
    %83 = vmatprep.subr.bf16.mxu0 0
    %84 = vmatpush1.bf16.msra.mxu0 0
    %85 = vmatprep.subr.bf16.mxu0 0
    %86 = vmatpush1.bf16.msra.mxu0 0
    %87 = vmatprep.subr.bf16.mxu0 0
    %88 = vmatpush1.bf16.msra.mxu0 0
    %89 = vmatprep.subr.bf16.mxu0 0
    %90 = vmatpush1.bf16.msra.mxu0 0
    %91 = vmatprep.subr.bf16.mxu0 0
    %92 = vmatpush1.bf16.msra.mxu0 0
    %93 = vmatprep.subr.bf16.mxu0 0
    %94 = vmatpush1.bf16.msra.mxu0 0
    %95 = vmatprep.subr.bf16.mxu0 0
    %96 = vmatpush1.bf16.msra.mxu0 0
    %97 = vmatprep.subr.bf16.mxu0 0
    %98 = vmatpush1.bf16.msra.mxu0 0
    %99 = vmatprep.subr.bf16.mxu0 0
    %100 = vmatpush1.bf16.msra.mxu0 0
    %101 = vmatprep.mubr.bf16.mxu0 0
    %102 = vmatmul.mubr.bf16.gmra.mrb[0].mxu0 %v67
    %v103 = vpop.f32.mrb[0].mxu0
    %v104 = vadd.f32 0.0, %v103
    %v105 = vpop.f32.mrb[0].mxu0
    %v106 = vpop.f32.mrb[0].mxu0
    %v107 = vpop.f32.mrb[0].mxu0
    %108 = vdwg.mxu0
    %v109 = vstv %s46
    %v110 = vmul.f32 %v104, %v109
    %111 = vst [vmem:[#allocation8] sm:$0xff] %v110
    // Predicated region
    $region22: #{tpu_custom_call.1} parent=1 // pred_check
      _
    $region23: #{tpu_custom_call.1} parent=1 // pred_check_branch
      %113 = sbr.rel (0) target = $region25
    $region24: #{tpu_custom_call.1} parent=1 // pred_region
      %s115 = ssub.s32 128, 128
      %116 = vsyncadd [#allocation5], %s115
      %s118 = sshll.u32 [#allocation8], 4
      %s119 = int_to_ptr.vmem [resolvable:$true] %s118
      %121 = dma.vmem_to_hbm [thread:$0]  %s119, 128, %s3, [#allocation5]
    $region25: #{tpu_custom_call.1} parent=1 // pred_fallthru
      _
    // Predicated region
    $region26: #{tpu_custom_call.1} parent=1 // pred_check
      _
    $region27: #{tpu_custom_call.1} parent=1 // pred_check_branch
      %123 = sbr.rel (0) target = $region29
    $region28: #{tpu_custom_call.1} parent=1 // pred_region
      %124 = dma.done [#allocation5], 128
    $region29: #{tpu_custom_call.1} parent=1 // pred_fallthru
      _
    %125 = vsyncpa [#allocation4], 1
    %126 = vsyncpa [#allocation7], 1
    %127 = vsyncpa [#allocation5], 1

</llo_original>
